<compile_context>
chip_gen: v7x
topology: tpu7x:2x2x1
jax: 0.10.0
libtpu: 0.0.40
codegen_flags: <defaults>
</compile_context>

<pallas_src>
import functools

import jax
import jax.numpy as jnp
from jax.experimental import pallas as pl
from jax.experimental.pallas import tpu as pltpu

_HPAD = 128     # hidden dim (20) padded to one full lane register
_BT_MAX = 256   # max batch tile (rows)
_ROW = 8        # sublane granularity


def _mlp_kernel(x_ref, w1_ref, b1_ref, w2_ref, b2_ref, o_ref):
    # x_ref : (BT, state_dim) f32
    # w1_ref: (state_dim, 128) bf16    (hidden cols padded with zeros)
    # b1_ref: (1, 128) f32             (hidden lanes padded with zeros)
    # w2_ref: (128, num_actions) bf16  (padded hidden rows are zero)
    # b2_ref: (1, num_actions) f32
    # o_ref : (BT, num_actions) f32
    x = x_ref[...].astype(jnp.bfloat16)                      # bf16-in / f32-acc MXU
    acc1 = jnp.dot(x, w1_ref[...], preferred_element_type=jnp.float32) + b1_ref[...]
    h1 = jnp.tanh(acc1).astype(jnp.bfloat16)                 # padded lanes: tanh(0)=0
    o_ref[...] = (
        jnp.dot(h1, w2_ref[...], preferred_element_type=jnp.float32) + b2_ref[...]
    ).astype(o_ref.dtype)


def init_params(key, state_dim, hidden, num_actions):
    """Deterministic init mimicking nn.Linear's uniform(-1/sqrt(fan_in), +).
    Weights stored as [in, out] (transpose of PyTorch's [out, in])."""
    k1, k2, k3, k4 = jax.random.split(key, 4)
    lim1 = 1.0 / jnp.sqrt(jnp.float32(state_dim))
    lim2 = 1.0 / jnp.sqrt(jnp.float32(hidden))
    w1 = jax.random.uniform(k1, (state_dim, hidden), jnp.float32, -lim1, lim1)
    b1 = jax.random.uniform(k2, (hidden,), jnp.float32, -lim1, lim1)
    w2 = jax.random.uniform(k3, (hidden, num_actions), jnp.float32, -lim2, lim2)
    b2 = jax.random.uniform(k4, (num_actions,), jnp.float32, -lim2, lim2)
    return w1, b1, w2, b2


def pack_params(w1, b1, w2, b2):
    """One-time padding/packing (hoisted out of the forward call).

    Returns:
      w1_p: (state_dim, 128)        bf16  -- hidden cols zero-padded
      b1_p: (1, 128)                f32   -- hidden lanes zero-padded
      w2_p: (128, num_actions)      bf16  -- padded hidden rows are zero
      b2_p: (1, num_actions)        f32
    The zero padding of W1 cols / b1 lanes / W2 rows guarantees the padded hidden
    lanes contribute exactly zero to the output.
    """
    state_dim, hidden = w1.shape
    hidden2, num_actions = w2.shape
    assert hidden == hidden2 and hidden <= _HPAD
    w1_p = jnp.pad(w1, ((0, 0), (0, _HPAD - hidden))).astype(jnp.bfloat16)
    b1_p = jnp.pad(b1, (0, _HPAD - hidden))[None, :].astype(jnp.float32)
    w2_p = jnp.pad(w2, ((0, _HPAD - hidden), (0, 0))).astype(jnp.bfloat16)
    b2_p = b2[None, :].astype(jnp.float32)
    return w1_p, b1_p, w2_p, b2_p


def _round_up(x, m):
    return ((x + m - 1) // m) * m


@functools.partial(jax.jit, static_argnames=("num_actions",))
def net_forward_no_sent(states, w1_p, b1_p, w2_p, b2_p, *, num_actions):
    """states: [state_dim] (single state, as in forward_no_sent) or [B, state_dim].
    Returns p: [B, num_actions] float32 (B == 1 for a single state)."""
    if states.ndim == 1:
        states = states[None, :]               # states[np.newaxis, :]
    B, state_dim = states.shape

    # Batch tile: one tile for small batches (grid=1), 256-row tiles for large ones
    # (fills the MXU, amortizes per-step overhead, gives v7x's 2 TCs real tiles).
    if B <= _BT_MAX:
        bt = _round_up(B, _ROW)
    else:
        bt = _BT_MAX
    B_pad = _round_up(B, bt)
    grid = B_pad // bt

    x = states.astype(jnp.float32)
    if B_pad != B:
        x = jnp.pad(x, ((0, B_pad - B), (0, 0)))    # row padding only, no lane pad

    cost = pl.CostEstimate(
        flops=2 * B_pad * (state_dim * _HPAD + _HPAD * num_actions),
        transcendentals=B_pad * _HPAD,
        bytes_accessed=(x.size * 4 + w1_p.size * 2 + w2_p.size * 2
                        + b1_p.size * 4 + b2_p.size * 4
                        + B_pad * num_actions * 4),
    )

    out = pl.pallas_call(
        _mlp_kernel,
        out_shape=jax.ShapeDtypeStruct((B_pad, num_actions), jnp.float32),
        grid=(grid,),
        in_specs=[
            pl.BlockSpec((bt, state_dim), lambda i: (i, 0)),       # x tile (no lane pad)
            pl.BlockSpec((state_dim, _HPAD), lambda i: (0, 0)),    # W1 (grid-invariant)
            pl.BlockSpec((1, _HPAD), lambda i: (0, 0)),            # b1
            pl.BlockSpec((_HPAD, num_actions), lambda i: (0, 0)),  # W2
            pl.BlockSpec((1, num_actions), lambda i: (0, 0)),      # b2
        ],
        out_specs=pl.BlockSpec((bt, num_actions), lambda i: (i, 0)),
        compiler_params=pltpu.CompilerParams(
            dimension_semantics=("parallel",),   # shard batch tiles across TCs (v7x)
        ),
        cost_estimate=cost,
    )(x, w1_p, b1_p, w2_p, b2_p)

    # Padded batch rows contain tanh(b1)@W2+b2 garbage; the row slice is mandatory.
    return out[:B]


if __name__ == "__main__":
    # Small shapes consistent with the module: linear1: state_dim -> 20,
    # linear2: 20 -> num_actions.
    STATE_DIM = 16
    HIDDEN = 20
    NUM_ACTIONS = 8

    key = jax.random.PRNGKey(0)
    k_params, k_state, k_batch, k_big = jax.random.split(key, 4)

    w1, b1, w2, b2 = init_params(k_params, STATE_DIM, HIDDEN, NUM_ACTIONS)
    w1_p, b1_p, w2_p, b2_p = pack_params(w1, b1, w2, b2)   # one-time constant buffers

    # Reference uses the same bf16-rounded operands the kernel feeds the MXU,
    # with f32 accumulation (same math, so tolerances stay tight).
    w1q = w1.astype(jnp.bfloat16).astype(jnp.float32)
    w2q = w2.astype(jnp.bfloat16).astype(jnp.float32)

    def ref_fn(x2d):
        xq = x2d.astype(jnp.bfloat16).astype(jnp.float32)
        h1 = jnp.tanh(jnp.dot(xq, w1q, precision=jax.lax.Precision.HIGHEST) + b1)
        h1q = h1.astype(jnp.bfloat16).astype(jnp.float32)
        return jnp.dot(h1q, w2q, precision=jax.lax.Precision.HIGHEST) + b2

    # --- single-state path (matches forward_no_sent: states[np.newaxis, :]) ---
    states = jax.random.normal(k_state, (STATE_DIM,), jnp.float32)
    p = net_forward_no_sent(states, w1_p, b1_p, w2_p, b2_p, num_actions=NUM_ACTIONS)
    p = jax.block_until_ready(p)
    assert p.shape == (1, NUM_ACTIONS)
    assert jnp.allclose(p, ref_fn(states[None, :]), atol=2e-3, rtol=2e-3)

    # --- small batch (single tile, grid=1) ---
    states_b = jax.random.normal(k_batch, (32, STATE_DIM), jnp.float32)
    pb = net_forward_no_sent(states_b, w1_p, b1_p, w2_p, b2_p, num_actions=NUM_ACTIONS)
    pb = jax.block_until_ready(pb)
    assert pb.shape == (32, NUM_ACTIONS)
    assert jnp.allclose(pb, ref_fn(states_b), atol=2e-3, rtol=2e-3)

    # --- larger batch (exercises 256-row tiles, row padding, multi-tile grid) ---
    states_big = jax.random.normal(k_big, (300, STATE_DIM), jnp.float32)
    pg = net_forward_no_sent(states_big, w1_p, b1_p, w2_p, b2_p, num_actions=NUM_ACTIONS)
    pg = jax.block_until_ready(pg)
    assert pg.shape == (300, NUM_ACTIONS)
    assert jnp.allclose(pg, ref_fn(states_big), atol=2e-3, rtol=2e-3)

    print("KERNEL_OK")
</pallas_src>

<mosaic_0001>
module attributes {stable_mosaic.version = 11 : i64} {
  func.func @_mlp_kernel(%arg0: i32, %arg1: memref<8x16xf32, #tpu.memory_space<vmem>>, %arg2: memref<16x128xbf16, #tpu.memory_space<vmem>>, %arg3: memref<1x128xf32, #tpu.memory_space<vmem>>, %arg4: memref<128x8xbf16, #tpu.memory_space<vmem>>, %arg5: memref<1x8xf32, #tpu.memory_space<vmem>>, %arg6: memref<8x8xf32, #tpu.memory_space<vmem>>) attributes {dimension_semantics = [#tpu.dimension_semantics<parallel>], iteration_bounds = array<i64: 1>, scalar_prefetch = 0 : i64, scratch_operands = 0 : i64, tpu.core_type = #tpu.core_type<tc>, window_params = [{transform_indices = @transform_0, window_bounds = array<i64: 8, 16>}, {pipeline_mode = #tpu.pipeline_mode<synchronous>, transform_indices = @transform_1, window_bounds = array<i64: 16, 128>}, {pipeline_mode = #tpu.pipeline_mode<synchronous>, transform_indices = @transform_2, window_bounds = array<i64: 1, 128>}, {pipeline_mode = #tpu.pipeline_mode<synchronous>, transform_indices = @transform_3, window_bounds = array<i64: 128, 8>}, {pipeline_mode = #tpu.pipeline_mode<synchronous>, transform_indices = @transform_4, window_bounds = array<i64: 1, 8>}, {transform_indices = @transform_5, window_bounds = array<i64: 8, 8>}]} {
    %c0 = arith.constant 0 : index
    %c0_0 = arith.constant 0 : index
    %0 = vector.load %arg1[%c0, %c0_0] : memref<8x16xf32, #tpu.memory_space<vmem>>, vector<8x16xf32>
    %1 = arith.truncf %0 : vector<8x16xf32> to vector<8x16xbf16>
    %c0_1 = arith.constant 0 : index
    %c0_2 = arith.constant 0 : index
    %2 = vector.load %arg2[%c0_1, %c0_2] : memref<16x128xbf16, #tpu.memory_space<vmem>>, vector<16x128xbf16>
    %cst = arith.constant dense<0.000000e+00> : vector<8x128xf32>
    %3 = tpu.matmul %1, %2, %cst {dimension_numbers = #tpu.dot_dimension_numbers<[1], [0], [0], [1], [0, 0, 1, 1], [], []>} : vector<8x16xbf16>, vector<16x128xbf16>, vector<8x128xf32> -> vector<8x128xf32>
    %c0_3 = arith.constant 0 : index
    %c0_4 = arith.constant 0 : index
    %4 = vector.load %arg3[%c0_3, %c0_4] : memref<1x128xf32, #tpu.memory_space<vmem>>, vector<1x128xf32>
    %5 = vector.broadcast %4 : vector<1x128xf32> to vector<8x128xf32>
    %6 = arith.addf %3, %5 : vector<8x128xf32>
    %7 = math.tanh %6 : vector<8x128xf32>
    %8 = arith.truncf %7 : vector<8x128xf32> to vector<8x128xbf16>
    %c0_5 = arith.constant 0 : index
    %c0_6 = arith.constant 0 : index
    %9 = vector.load %arg4[%c0_5, %c0_6] : memref<128x8xbf16, #tpu.memory_space<vmem>>, vector<128x8xbf16>
    %cst_7 = arith.constant dense<0.000000e+00> : vector<8x8xf32>
    %10 = tpu.matmul %8, %9, %cst_7 {dimension_numbers = #tpu.dot_dimension_numbers<[1], [0], [0], [1], [0, 0, 1, 1], [], []>} : vector<8x128xbf16>, vector<128x8xbf16>, vector<8x8xf32> -> vector<8x8xf32>
    %c0_8 = arith.constant 0 : index
    %c0_9 = arith.constant 0 : index
    %11 = vector.load %arg5[%c0_8, %c0_9] : memref<1x8xf32, #tpu.memory_space<vmem>>, vector<1x8xf32>
    %12 = vector.broadcast %11 : vector<1x8xf32> to vector<8x8xf32>
    %13 = arith.addf %10, %12 : vector<8x8xf32>
    %c0_10 = arith.constant 0 : index
    %c0_11 = arith.constant 0 : index
    %14 = vector.load %arg6[%c0_10, %c0_11] : memref<8x8xf32, #tpu.memory_space<vmem>>, vector<8x8xf32>
    tpu.vector_store %arg6[%c0_10, %c0_11], %13 {strides = array<i32>} : memref<8x8xf32, #tpu.memory_space<vmem>>, vector<8x8xf32>,
    return
  }
  func.func @transform_0(%arg0: i32) -> (i32, i32) {
    %c0_i32 = arith.constant 0 : i32
    %c0_i32_0 = arith.constant 0 : i32
    return %arg0, %c0_i32 : i32, i32
  }
  func.func @transform_1(%arg0: i32) -> (i32, i32) {
    %c0_i32 = arith.constant 0 : i32
    %c0_i32_0 = arith.constant 0 : i32
    %c0_i32_1 = arith.constant 0 : i32
    return %c0_i32, %c0_i32_0 : i32, i32
  }
  func.func @transform_2(%arg0: i32) -> (i32, i32) {
    %c0_i32 = arith.constant 0 : i32
    %c0_i32_0 = arith.constant 0 : i32
    %c0_i32_1 = arith.constant 0 : i32
    return %c0_i32, %c0_i32_0 : i32, i32
  }
  func.func @transform_3(%arg0: i32) -> (i32, i32) {
    %c0_i32 = arith.constant 0 : i32
    %c0_i32_0 = arith.constant 0 : i32
    %c0_i32_1 = arith.constant 0 : i32
    return %c0_i32, %c0_i32_0 : i32, i32
  }
  func.func @transform_4(%arg0: i32) -> (i32, i32) {
    %c0_i32 = arith.constant 0 : i32
    %c0_i32_0 = arith.constant 0 : i32
    %c0_i32_1 = arith.constant 0 : i32
    return %c0_i32, %c0_i32_0 : i32, i32
  }
  func.func @transform_5(%arg0: i32) -> (i32, i32) {
    %c0_i32 = arith.constant 0 : i32
    %c0_i32_0 = arith.constant 0 : i32
    return %arg0, %c0_i32 : i32, i32
  }
}

</mosaic_0001>

<llo_original>
// kernel: net_forward_no_sent.1
$region0: #{net_forward_no_sent.1}
  #allocation0 [shape = 'u32[]', space=smem, size = 0x4, offset = 0x4, fixed_abs, tag = 'smem constant byte address 0x4 - core index']
  #allocation1 [shape = 'u32[144,128]{1,0:T(1,128)}', space=vmem, size = 0x12000, scoped, tag = 'internal scratch']
  %s0 = inlined_call_operand.vmem [shape: f32[8,16], index: 0, kind: input, shape index: {}]
  %s1 = inlined_call_operand.vmem [shape: bf16[16,128], index: 1, kind: input, shape index: {}]
  %s2 = inlined_call_operand.vmem [shape: f32[1,128], index: 2, kind: input, shape index: {}]
  %s3 = inlined_call_operand.vmem [shape: bf16[128,8], index: 3, kind: input, shape index: {}]
  %s4 = inlined_call_operand.vmem [shape: f32[1,8], index: 4, kind: input, shape index: {}]
  %s5 = inlined_call_operand.vmem [shape: f32[8,8], index: 5, kind: output, shape index: {}]
  %s6 = sld [smem:[#allocation0]]
  $region30: #{net_forward_no_sent.1} parent=0
    _
  %s8 = ssub.s32 1, %s6
  %s9 = scalar_select 0, %s8, %s6
  // Predicated region
  $region2: #{net_forward_no_sent.1} parent=0 // pred_check
    _
  $region3: #{net_forward_no_sent.1} parent=0 // pred_check_branch
    %11 = sbr.rel (0) target = $region5
  $region4: #{net_forward_no_sent.1} parent=0 // pred_region
    _
  $region5: #{net_forward_no_sent.1} parent=0 // pred_fallthru
    _
  // Predicated region
  $region6: #{net_forward_no_sent.1} parent=0 // pred_check
    _
  $region7: #{net_forward_no_sent.1} parent=0 // pred_check_branch
    %13 = sbr.rel (0) target = $region9
  $region8: #{net_forward_no_sent.1} parent=0 // pred_region
    _
  $region9: #{net_forward_no_sent.1} parent=0 // pred_fallthru
    _
  // Predicated region
  $region10: #{net_forward_no_sent.1} parent=0 // pred_check
    _
  $region11: #{net_forward_no_sent.1} parent=0 // pred_check_branch
    %15 = sbr.rel (0) target = $region13
  $region12: #{net_forward_no_sent.1} parent=0 // pred_region
    _
  $region13: #{net_forward_no_sent.1} parent=0 // pred_fallthru
    _
  // Predicated region
  $region14: #{net_forward_no_sent.1} parent=0 // pred_check
    _
  $region15: #{net_forward_no_sent.1} parent=0 // pred_check_branch
    %17 = sbr.rel (0) target = $region17
  $region16: #{net_forward_no_sent.1} parent=0 // pred_region
    _
  $region17: #{net_forward_no_sent.1} parent=0 // pred_fallthru
    _
  // Predicated region
  $region18: #{net_forward_no_sent.1} parent=0 // pred_check
    _
  $region19: #{net_forward_no_sent.1} parent=0 // pred_check_branch
    %19 = sbr.rel (0) target = $region21
  $region20: #{net_forward_no_sent.1} parent=0 // pred_region
    _
  $region21: #{net_forward_no_sent.1} parent=0 // pred_fallthru
    _
  %v21 = vld [vmem:[%s0] sm:$0xff]
  %v22 = vpack.c.bf16 %v21, %v21
  %v23 = vld [vmem:[%s1] sm:$0xf]
  %v24 = vld [vmem:[%s1 + $0x4] sm:$0xf]
  %v25 = vld [vmem:[%s2] sm:$0x1]
  %v27 = vlaneseq
  %v28 = vshrl.u32 %v27, 7
  %v29 = vsub.s32 0, %v28
  %v30 = vrot.slane %v25, %v29
  %v34 = vunpack.c.l.b16 %v23
  %v35 = vunpack.c.l.b16 %v24
  %v36 = vpack.c.b16 %v35, %v34
  %vm38 = vcmask 130048
  %v40 = vsel %vm38, %v22, 0
  %42 = vmatprep.subr.bf16.mxu0 0
  %43 = vmatpush1.bf16.msra.mxu0 %v36
  %44 = vmatprep.subr.bf16.mxu0 0
  %45 = vmatpush1.bf16.msra.mxu0 0
  %46 = vmatprep.subr.bf16.mxu0 0
  %47 = vmatpush1.bf16.msra.mxu0 0
  %48 = vmatprep.subr.bf16.mxu0 0
  %49 = vmatpush1.bf16.msra.mxu0 0
  %50 = vmatprep.subr.bf16.mxu0 0
  %51 = vmatpush1.bf16.msra.mxu0 0
  %52 = vmatprep.subr.bf16.mxu0 0
  %53 = vmatpush1.bf16.msra.mxu0 0
  %54 = vmatprep.subr.bf16.mxu0 0
  %55 = vmatpush1.bf16.msra.mxu0 0
  %56 = vmatprep.subr.bf16.mxu0 0
  %57 = vmatpush1.bf16.msra.mxu0 0
  %58 = vmatprep.subr.bf16.mxu0 0
  %59 = vmatpush1.bf16.msra.mxu0 0
  %60 = vmatprep.subr.bf16.mxu0 0
  %61 = vmatpush1.bf16.msra.mxu0 0
  %62 = vmatprep.subr.bf16.mxu0 0
  %63 = vmatpush1.bf16.msra.mxu0 0
  %64 = vmatprep.subr.bf16.mxu0 0
  %65 = vmatpush1.bf16.msra.mxu0 0
  %66 = vmatprep.subr.bf16.mxu0 0
  %67 = vmatpush1.bf16.msra.mxu0 0
  %68 = vmatprep.subr.bf16.mxu0 0
  %69 = vmatpush1.bf16.msra.mxu0 0
  %70 = vmatprep.subr.bf16.mxu0 0
  %71 = vmatpush1.bf16.msra.mxu0 0
  %72 = vmatprep.subr.bf16.mxu0 0
  %73 = vmatpush1.bf16.msra.mxu0 0
  %74 = vmatprep.mubr.bf16.mxu0 0
  %75 = vmatmul.mubr.bf16.gmra.mrb[0].mxu0 %v40
  %v76 = vpop.f32.mrb[0].mxu0
  %v77 = vadd.f32 %v30, %v76
  %v78 = vpop.f32.mrb[0].mxu0
  %v79 = vpop.f32.mrb[0].mxu0
  %v80 = vpop.f32.mrb[0].mxu0
  %81 = vdwg.mxu0
  %v82 = vtanh.pop %v77
  %v83 = vpack.c.bf16 %v82, %v82
  %v84 = vld [vmem:[%s3] sm:$0xf]
  %v85 = vld [vmem:[%s3 + $0x4] sm:$0xf]
  %v86 = vld [vmem:[%s3 + $0x8] sm:$0xf]
  %v87 = vld [vmem:[%s3 + $0xc] sm:$0xf]
  %v88 = vld [vmem:[%s3 + $0x10] sm:$0xf]
  %v89 = vld [vmem:[%s3 + $0x14] sm:$0xf]
  %v90 = vld [vmem:[%s3 + $0x18] sm:$0xf]
  %v91 = vld [vmem:[%s3 + $0x1c] sm:$0xf]
  %v92 = vld [vmem:[%s3 + $0x20] sm:$0xf]
  %v93 = vld [vmem:[%s3 + $0x24] sm:$0xf]
  %v94 = vld [vmem:[%s3 + $0x28] sm:$0xf]
  %v95 = vld [vmem:[%s3 + $0x2c] sm:$0xf]
  %v96 = vld [vmem:[%s3 + $0x30] sm:$0xf]
  %v97 = vld [vmem:[%s3 + $0x34] sm:$0xf]
  %v98 = vld [vmem:[%s3 + $0x38] sm:$0xf]
  %v99 = vld [vmem:[%s3 + $0x3c] sm:$0xf]
  %v100 = vld [vmem:[%s4] sm:$0x1]
  %v102 = vlaneseq
  %v103 = vshrl.u32 %v102, 7
  %v104 = vsub.s32 0, %v103
  %v105 = vrot.slane %v100, %v104
  %v123 = vunpack.c.l.b16 %v84
  %v124 = vunpack.c.l.b16 %v85
  %v125 = vunpack.c.l.b16 %v86
  %v126 = vunpack.c.l.b16 %v87
  %v127 = vunpack.c.l.b16 %v88
  %v128 = vunpack.c.l.b16 %v89
  %v129 = vunpack.c.l.b16 %v90
  %v130 = vunpack.c.l.b16 %v91
  %v131 = vunpack.c.l.b16 %v92
  %v132 = vunpack.c.l.b16 %v93
  %v133 = vunpack.c.l.b16 %v94
  %v134 = vunpack.c.l.b16 %v95
  %v135 = vunpack.c.l.b16 %v96
  %v136 = vunpack.c.l.b16 %v97
  %v137 = vunpack.c.l.b16 %v98
  %v138 = vunpack.c.l.b16 %v99
  %v139 = vpack.c.b16 %v124, %v123
  %v140 = vpack.c.b16 %v126, %v125
  %v141 = vpack.c.b16 %v128, %v127
  %v142 = vpack.c.b16 %v130, %v129
  %v143 = vpack.c.b16 %v132, %v131
  %v144 = vpack.c.b16 %v134, %v133
  %v145 = vpack.c.b16 %v136, %v135
  %v146 = vpack.c.b16 %v138, %v137
  %155 = vmatprep.subr.bf16.mxu0 0
  %156 = vmatpush1.bf16.msra.mxu0 %v139
  %157 = vmatprep.subr.bf16.mxu0 0
  %158 = vmatpush1.bf16.msra.mxu0 %v140
  %159 = vmatprep.subr.bf16.mxu0 0
  %160 = vmatpush1.bf16.msra.mxu0 %v141
  %161 = vmatprep.subr.bf16.mxu0 0
  %162 = vmatpush1.bf16.msra.mxu0 %v142
  %163 = vmatprep.subr.bf16.mxu0 0
  %164 = vmatpush1.bf16.msra.mxu0 %v143
  %165 = vmatprep.subr.bf16.mxu0 0
  %166 = vmatpush1.bf16.msra.mxu0 %v144
  %167 = vmatprep.subr.bf16.mxu0 0
  %168 = vmatpush1.bf16.msra.mxu0 %v145
  %169 = vmatprep.subr.bf16.mxu0 0
  %170 = vmatpush1.bf16.msra.mxu0 %v146
  %171 = vmatprep.subr.bf16.mxu0 0
  %172 = vmatpush1.bf16.msra.mxu0 0
  %173 = vmatprep.subr.bf16.mxu0 0
  %174 = vmatpush1.bf16.msra.mxu0 0
  %175 = vmatprep.subr.bf16.mxu0 0
  %176 = vmatpush1.bf16.msra.mxu0 0
  %177 = vmatprep.subr.bf16.mxu0 0
  %178 = vmatpush1.bf16.msra.mxu0 0
  %179 = vmatprep.subr.bf16.mxu0 0
  %180 = vmatpush1.bf16.msra.mxu0 0
  %181 = vmatprep.subr.bf16.mxu0 0
  %182 = vmatpush1.bf16.msra.mxu0 0
  %183 = vmatprep.subr.bf16.mxu0 0
  %184 = vmatpush1.bf16.msra.mxu0 0
  %185 = vmatprep.subr.bf16.mxu0 0
  %186 = vmatpush1.bf16.msra.mxu0 0
  %187 = vmatprep.mubr.bf16.mxu0 0
  %188 = vmatmul.mubr.bf16.gmra.mrb[0].mxu0 %v83
  %v189 = vpop.f32.mrb[0].mxu0
  %v190 = vadd.f32 %v105, %v189
  %v191 = vpop.f32.mrb[0].mxu0
  %v192 = vpop.f32.mrb[0].mxu0
  %v193 = vpop.f32.mrb[0].mxu0
  %194 = vdwg.mxu0
  %vm195 = vcmask 64512
  %196 = vst.msk [vmem:[%s5] sm:$0xff] %vm195, %v190
  // Predicated region
  $region22: #{net_forward_no_sent.1} parent=0 // pred_check
    _
  $region23: #{net_forward_no_sent.1} parent=0 // pred_check_branch
    %198 = sbr.rel (0) target = $region25
  $region24: #{net_forward_no_sent.1} parent=0 // pred_region
    _
  $region25: #{net_forward_no_sent.1} parent=0 // pred_fallthru
    _
  // Predicated region
  $region26: #{net_forward_no_sent.1} parent=0 // pred_check
    _
  $region27: #{net_forward_no_sent.1} parent=0 // pred_check_branch
    %200 = sbr.rel (0) target = $region29
  $region28: #{net_forward_no_sent.1} parent=0 // pred_region
    _
  $region29: #{net_forward_no_sent.1} parent=0 // pred_fallthru
    _

</llo_original>
